<compile_context>
chip_gen: v6e
topology: v6e:2x2x1
jax: 0.10.0
libtpu: 0.0.40
codegen_flags: <defaults>
</compile_context>

<pallas_src>
import functools

import jax
import jax.numpy as jnp
from jax.experimental import pallas as pl
from jax.experimental.pallas import tpu as pltpu


def _round_up(x, m):
    return (x + m - 1) // m * m


def _cdiv(a, b):
    return -(-a // b)


def _vmem_capacity_bytes():
    """Physical VMEM per core; conservative 64 MiB fallback (valid on all gens)."""
    try:
        return int(pltpu.get_tpu_info().vmem_capacity_bytes)
    except Exception:
        return 64 << 20


def _vmem_estimate_bytes(Tc, Bc, E, Hp, O, L, Lk):
    """f32 bytes: double-buffered I/O blocks + double-buffered weights +
    persistent scratch + large matmul-output transients."""
    io_blocks = 2 * Tc * Bc * E + 2 * Tc * Bc * O
    weights = 2 * (E * Hp + Hp + Hp * Hp + Lk * 2 * Hp * Hp
                   + Lk * Hp + Hp * O + O)
    scratch = L * Bc * Hp + Tc * Bc * Hp
    transients = Tc * Bc * Hp + Tc * Bc * O
    return 4 * (io_blocks + weights + scratch + transients)


def _rnn_kernel(x_ref, Ww_ref, b0_ref, U0_ref, WkU_ref, bk_ref, Vw_ref, Vb_ref,
                out_ref, z_state, xw_ref, *, num_layers):
    """One (batch-tile, time-chunk) grid step.

    x_ref:   [Tc, Bc, E]    time-major embedding chunk (E unpadded)
    Ww_ref:  [E, Hp]        input projection weight
    b0_ref:  [1, Hp]        combined layer-0 bias  (Wb + Ub[0])
    U0_ref:  [Hp, Hp]       layer-0 recurrent weight (Uks[0])
    WkU_ref: [Lk, 2Hp, Hp]  fused stacked weight [Wks[l]; Uks[l]]
    bk_ref:  [Lk, 1, Hp]    combined stacked bias (Wkb[l] + Ub[l])
    Vw_ref:  [Hp, O]        output projection weight (O unpadded), Vb_ref: [1, O]
    out_ref: [Tc, Bc, O]
    z_state: [L, Bc, Hp]    persistent hidden state (VMEM scratch)
    xw_ref:  [Tc, Bc, Hp]   input projections, reused in place as hidden history
    """
    Tc, Bc, E = x_ref.shape
    Hp = U0_ref.shape[1]
    O = out_ref.shape[-1]

    # A new batch tile starts at its first time-chunk: reset hidden states.
    @pl.when(pl.program_id(1) == 0)
    def _():
        z_state[...] = jnp.zeros_like(z_state)

    # ---- hoisted input projection: one MXU-filling matmul per chunk ------
    x2d = x_ref[...].reshape(Tc * Bc, E)           # Bc % 8 == 0 -> free reshape
    xw = jnp.dot(x2d, Ww_ref[...],
                 preferred_element_type=jnp.float32) + b0_ref[...]
    xw_ref[...] = xw.reshape(Tc, Bc, Hp)

    # Keep biases as [1, Hp]; broadcast happens at the add (stride-0, ~free).
    bks = [bk_ref[l] for l in range(num_layers - 1)]

    # ---- serial recurrence: one matmul per layer per step -----------------
    def _step(t):
        z = jnp.tanh(
            xw_ref[t]
            + jnp.dot(z_state[0], U0_ref[...],
                      preferred_element_type=jnp.float32))
        z_state[0] = z
        for l in range(num_layers - 1):
            # Fused [z | z_prev[l+1]] @ [Wks[l]; Uks[l]] : single K=2*Hp matmul.
            # NOTE: Uks[l] (not Uks[l+1]) for hidden layer l+1 — matches the
            # reference module exactly.
            zz = jnp.concatenate([z, z_state[l + 1]], axis=-1)
            z = jnp.tanh(
                jnp.dot(zz, WkU_ref[l], preferred_element_type=jnp.float32)
                + bks[l])
            z_state[l + 1] = z
        # xw_ref[t] has been consumed -> reuse it as the hidden-state history.
        xw_ref[t] = z

    # 2x-unrolled serial loop (Tc is a multiple of 8, hence even).
    @pl.loop(0, Tc // 2)
    def _(i):
        t = 2 * i
        _step(t)
        _step(t + 1)

    # ---- hoisted output projection off the aliased history buffer --------
    z2d = xw_ref[...].reshape(Tc * Bc, Hp)
    y = jnp.dot(z2d, Vw_ref[...],
                preferred_element_type=jnp.float32) + Vb_ref[...]
    out_ref[...] = y.reshape(Tc, Bc, O).astype(out_ref.dtype)


def rnn_forward(embeddings, params, *, time_chunk=128, max_batch_tile=256):
    """embeddings: [B, T, E] float32 -> [B, T, O] float32."""
    Ww, Wb, Uw, Ub, Wkw, Wkb, Vw, Vb = params
    B, T, E = embeddings.shape
    L, _, H = Uw.shape
    O = Vw.shape[1]
    Lk = max(L - 1, 1)
    f32 = jnp.float32

    # ---- hardware-friendly sizes ------------------------------------------
    # Only the hidden dim is padded to 128 lanes (weights / scratch only).
    # Streamed x / out keep their natural last dims (full-array last dims are
    # always legal block dims), so their HBM traffic is not inflated.
    Hp = _round_up(H, 128)
    B8 = _round_up(B, 8)
    mbt = max(8, (max_batch_tile // 8) * 8)
    Bc = min(B8, mbt)

    # Balance time-chunk sizes across T (no nearly-empty trailing chunk).
    Tc_req = max(8, min(time_chunk, _round_up(T, 8)))
    Tc = min(_round_up(_cdiv(T, _cdiv(T, Tc_req)), 8), _round_up(T, 8))

    # ---- generation-aware VMEM budget + automatic tile shrink --------------
    cap = _vmem_capacity_bytes()                 # 128 MiB v5e/v6e, 64 MiB v7x
    budget = int(cap * 0.8)
    while _vmem_estimate_bytes(Tc, Bc, E, Hp, O, L, Lk) > budget:
        if Tc > 8:
            Tc = max(8, _round_up(Tc // 2, 8))
        elif Bc > 8:
            Bc = max(8, _round_up(Bc // 2, 8))
        else:
            break

    # On multi-TensorCore chips (v7x) give the "parallel" batch axis at least
    # one tile per core; no effect on single-core chips.
    num_cores = int(getattr(jax.devices()[0], "num_cores", 1) or 1)
    while num_cores > 1 and _cdiv(B8, Bc) < num_cores and Bc >= 16:
        Bc = max(8, _round_up(Bc // 2, 8))

    Bp = _round_up(B8, Bc)
    nb = Bp // Bc
    nt = _cdiv(T, Tc)
    Tp = nt * Tc

    est = _vmem_estimate_bytes(Tc, Bc, E, Hp, O, L, Lk)
    vmem_limit = max(32 << 20, min(int(est * 1.4) + (2 << 20), int(cap * 0.95)))

    # ---- operand prep (zero padding keeps the math exact) ------------------
    # TODO(synk): consume embeddings in native [B,T,E] layout (and emit
    # [B,T,O]) to drop these wrapper-side HBM transpose passes; needs an
    # on-chip relayout of xw whose XLU cost has not been validated yet.
    x = jnp.transpose(embeddings, (1, 0, 2)).astype(f32)            # [T, B, E]
    x = jnp.pad(x, ((0, Tp - T), (0, Bp - B), (0, 0)))

    Wwp = jnp.pad(Ww.astype(f32), ((0, 0), (0, Hp - H)))             # [E, Hp]
    b0 = jnp.pad((Wb + Ub[0]).reshape(1, H).astype(f32),
                 ((0, 0), (0, Hp - H)))                              # [1, Hp]
    U0p = jnp.pad(Uw[0].astype(f32), ((0, Hp - H), (0, Hp - H)))     # [Hp, Hp]
    Wkwp = jnp.pad(Wkw.astype(f32), ((0, 0), (0, Hp - H), (0, Hp - H)))
    Ukp = jnp.pad(Uw[:Lk].astype(f32), ((0, 0), (0, Hp - H), (0, Hp - H)))
    WkUp = jnp.concatenate([Wkwp, Ukp], axis=1)                      # [Lk, 2Hp, Hp]
    bkp = jnp.pad((Wkb + Ub[:Lk]).astype(f32),
                  ((0, 0), (0, 0), (0, Hp - H)))                     # [Lk, 1, Hp]
    Vwp = jnp.pad(Vw.astype(f32), ((0, Hp - H), (0, 0)))             # [Hp, O]
    Vbp = Vb.reshape(1, O).astype(f32)                               # [1, O]

    grid_spec = pltpu.PrefetchScalarGridSpec(
        num_scalar_prefetch=0,
        grid=(nb, nt),
        in_specs=[
            pl.BlockSpec((Tc, Bc, E), lambda b, t: (t, b, 0)),       # x (streamed)
            # TODO(synk): pipeline_mode=pl.Buffered(1) on the constant weight
            # operands below would drop their second pipeline buffer.
            pl.BlockSpec((E, Hp), lambda b, t: (0, 0)),              # Ww
            pl.BlockSpec((1, Hp), lambda b, t: (0, 0)),              # b0
            pl.BlockSpec((Hp, Hp), lambda b, t: (0, 0)),             # U0
            pl.BlockSpec((Lk, 2 * Hp, Hp), lambda b, t: (0, 0, 0)),  # [Wk; U]
            pl.BlockSpec((Lk, 1, Hp), lambda b, t: (0, 0, 0)),       # bk
            pl.BlockSpec((Hp, O), lambda b, t: (0, 0)),              # Vw
            pl.BlockSpec((1, O), lambda b, t: (0, 0)),               # Vb
        ],
        out_specs=pl.BlockSpec((Tc, Bc, O), lambda b, t: (t, b, 0)),
        scratch_shapes=[
            pltpu.VMEM((L, Bc, Hp), f32),    # persistent hidden state
            pltpu.VMEM((Tc, Bc, Hp), f32),   # input projections / hidden history
        ],
    )

    out_tbo = pl.pallas_call(
        functools.partial(_rnn_kernel, num_layers=L),
        out_shape=jax.ShapeDtypeStruct((Tp, Bp, O), f32),
        grid_spec=grid_spec,
        compiler_params=pltpu.CompilerParams(
            dimension_semantics=("parallel", "arbitrary"),
            vmem_limit_bytes=vmem_limit),
    )(x, Wwp, b0, U0p, WkUp, bkp, Vwp, Vbp)

    return jnp.transpose(out_tbo[:T, :B, :], (1, 0, 2))              # [B, T, O]


def init_params(key, embedding_dim, hidden_dim, output_dim, num_layers):
    """Deterministic synthetic parameters; weights stored as [in, out]."""
    ks = jax.random.split(key, 8)
    scale = 0.2
    E, H, O, L = embedding_dim, hidden_dim, output_dim, num_layers
    Ww = scale * jax.random.normal(ks[0], (E, H), jnp.float32)
    Wb = scale * jax.random.normal(ks[1], (1, H), jnp.float32)
    Uw = scale * jax.random.normal(ks[2], (L, H, H), jnp.float32)
    Ub = scale * jax.random.normal(ks[3], (L, 1, H), jnp.float32)
    nwk = max(L - 1, 1)  # keep a dummy slot when L == 1 (unused by the kernel)
    Wkw = scale * jax.random.normal(ks[4], (nwk, H, H), jnp.float32)
    Wkb = scale * jax.random.normal(ks[5], (nwk, 1, H), jnp.float32)
    Vw = scale * jax.random.normal(ks[6], (H, O), jnp.float32)
    Vb = scale * jax.random.normal(ks[7], (1, O), jnp.float32)
    return (Ww, Wb, Uw, Ub, Wkw, Wkb, Vw, Vb)


def rnn_reference(embeddings, params):
    """Pure-JAX reference mirroring the PyTorch forward() op-for-op."""
    Ww, Wb, Uw, Ub, Wkw, Wkb, Vw, Vb = params
    B, T, E = embeddings.shape
    L, _, H = Uw.shape
    z_prev = [jnp.zeros((B, H), jnp.float32) for _ in range(L)]
    ys = []
    for t in range(T):
        xt = embeddings[:, t, :]
        z = jnp.tanh(xt @ Ww + Wb + z_prev[0] @ Uw[0] + Ub[0])
        z_prev[0] = z
        for l in range(L - 1):
            z = jnp.tanh(z @ Wkw[l] + Wkb[l] + z_prev[l + 1] @ Uw[l] + Ub[l])
            z_prev[l + 1] = z
        ys.append(z @ Vw + Vb)
    return jnp.stack(ys, axis=1)


if __name__ == "__main__":
    B, T = 2, 8           # batch, sequence length
    E, H, O = 32, 32, 16  # embedding_dim, hidden_dim, output_dim
    L = 2                 # num_layers

    key = jax.random.PRNGKey(0)
    k_x, k_p = jax.random.split(key)
    embeddings = jax.random.normal(k_x, (B, T, E), jnp.float32)
    params = init_params(k_p, E, H, O, L)

    out = jax.block_until_ready(rnn_forward(embeddings, params))
    ref = rnn_reference(embeddings, params)

    assert out.shape == (B, T, O), out.shape
    assert jnp.allclose(out, ref, atol=1e-4, rtol=1e-4), "mismatch vs reference"
    print("KERNEL_OK")
</pallas_src>

<mosaic_0001>
module attributes {stable_mosaic.version = 11 : i64} {
  func.func @_rnn_kernel(%arg0: i32, %arg1: i32, %arg2: memref<8x8x32xf32, #tpu.memory_space<vmem>>, %arg3: memref<32x128xf32, #tpu.memory_space<vmem>>, %arg4: memref<1x128xf32, #tpu.memory_space<vmem>>, %arg5: memref<128x128xf32, #tpu.memory_space<vmem>>, %arg6: memref<1x256x128xf32, #tpu.memory_space<vmem>>, %arg7: memref<1x1x128xf32, #tpu.memory_space<vmem>>, %arg8: memref<128x16xf32, #tpu.memory_space<vmem>>, %arg9: memref<1x16xf32, #tpu.memory_space<vmem>>, %arg10: memref<8x8x16xf32, #tpu.memory_space<vmem>>, %arg11: memref<2x8x128xf32, #tpu.memory_space<vmem>>, %arg12: memref<8x8x128xf32, #tpu.memory_space<vmem>>) attributes {dimension_semantics = [#tpu.dimension_semantics<parallel>, #tpu.dimension_semantics<arbitrary>], iteration_bounds = array<i64: 1, 1>, scalar_prefetch = 0 : i64, scratch_operands = 2 : i64, tpu.core_type = #tpu.core_type<tc>, window_params = [{transform_indices = @transform_0, window_bounds = array<i64: 8, 8, 32>}, {pipeline_mode = #tpu.pipeline_mode<synchronous>, transform_indices = @transform_1, window_bounds = array<i64: 32, 128>}, {pipeline_mode = #tpu.pipeline_mode<synchronous>, transform_indices = @transform_2, window_bounds = array<i64: 1, 128>}, {pipeline_mode = #tpu.pipeline_mode<synchronous>, transform_indices = @transform_3, window_bounds = array<i64: 128, 128>}, {pipeline_mode = #tpu.pipeline_mode<synchronous>, transform_indices = @transform_4, window_bounds = array<i64: 1, 256, 128>}, {pipeline_mode = #tpu.pipeline_mode<synchronous>, transform_indices = @transform_5, window_bounds = array<i64: 1, 1, 128>}, {pipeline_mode = #tpu.pipeline_mode<synchronous>, transform_indices = @transform_6, window_bounds = array<i64: 128, 16>}, {pipeline_mode = #tpu.pipeline_mode<synchronous>, transform_indices = @transform_7, window_bounds = array<i64: 1, 16>}, {transform_indices = @transform_8, window_bounds = array<i64: 8, 8, 16>}]} {
    %c0_i32 = arith.constant 0 : i32
    %0 = arith.cmpi eq, %arg1, %c0_i32 : i32
    %1 = arith.extui %0 : i1 to i32
    %c0_i32_0 = arith.constant 0 : i32
    %2 = arith.cmpi ne, %1, %c0_i32_0 : i32
    scf.if %2 {
      %cst_26 = arith.constant 0.000000e+00 : f32
      %24 = vector.broadcast %cst_26 : f32 to vector<2x8x128xf32>
      %c0_27 = arith.constant 0 : index
      %c0_28 = arith.constant 0 : index
      %c0_29 = arith.constant 0 : index
      %25 = vector.load %arg11[%c0_27, %c0_28, %c0_29] : memref<2x8x128xf32, #tpu.memory_space<vmem>>, vector<2x8x128xf32>
      tpu.vector_store %arg11[%c0_27, %c0_28, %c0_29], %24 {strides = array<i32>} : memref<2x8x128xf32, #tpu.memory_space<vmem>>, vector<2x8x128xf32>,
    } else {
    }
    %c0 = arith.constant 0 : index
    %c0_1 = arith.constant 0 : index
    %c0_2 = arith.constant 0 : index
    %3 = vector.load %arg2[%c0, %c0_1, %c0_2] : memref<8x8x32xf32, #tpu.memory_space<vmem>>, vector<8x8x32xf32>
    %4 = vector.shape_cast %3 : vector<8x8x32xf32> to vector<64x32xf32>
    %c0_3 = arith.constant 0 : index
    %c0_4 = arith.constant 0 : index
    %5 = vector.load %arg3[%c0_3, %c0_4] : memref<32x128xf32, #tpu.memory_space<vmem>>, vector<32x128xf32>
    %cst = arith.constant dense<0.000000e+00> : vector<64x128xf32>
    %6 = tpu.matmul %4, %5, %cst {dimension_numbers = #tpu.dot_dimension_numbers<[1], [0], [0], [1], [0, 0, 1, 1], [], []>} : vector<64x32xf32>, vector<32x128xf32>, vector<64x128xf32> -> vector<64x128xf32>
    %c0_5 = arith.constant 0 : index
    %c0_6 = arith.constant 0 : index
    %7 = vector.load %arg4[%c0_5, %c0_6] : memref<1x128xf32, #tpu.memory_space<vmem>>, vector<1x128xf32>
    %8 = vector.broadcast %7 : vector<1x128xf32> to vector<64x128xf32>
    %9 = arith.addf %6, %8 : vector<64x128xf32>
    %10 = vector.shape_cast %9 : vector<64x128xf32> to vector<8x8x128xf32>
    %c0_7 = arith.constant 0 : index
    %c0_8 = arith.constant 0 : index
    %c0_9 = arith.constant 0 : index
    %11 = vector.load %arg12[%c0_7, %c0_8, %c0_9] : memref<8x8x128xf32, #tpu.memory_space<vmem>>, vector<8x8x128xf32>
    tpu.vector_store %arg12[%c0_7, %c0_8, %c0_9], %10 {strides = array<i32>} : memref<8x8x128xf32, #tpu.memory_space<vmem>>, vector<8x8x128xf32>,
    %c0_10 = arith.constant 0 : index
    %c0_11 = arith.constant 0 : index
    %c0_12 = arith.constant 0 : index
    %12 = vector.load %arg7[%c0_10, %c0_11, %c0_12] : memref<1x1x128xf32, #tpu.memory_space<vmem>>, vector<1x1x128xf32>
    %13 = vector.shape_cast %12 : vector<1x1x128xf32> to vector<1x128xf32>
    %c0_i32_13 = arith.constant 0 : i32
    %c4_i32 = arith.constant 4 : i32
    %14 = arith.addi %c0_i32_13, %c4_i32 : i32
    %c1_i32 = arith.constant 1 : i32
    scf.for %arg13 = %c0_i32_13 to %14 step %c1_i32  : i32 {
      %c1_i32_26 = arith.constant 1 : i32
      %24 = arith.muli %arg13, %c1_i32_26 : i32
      %c0_i32_27 = arith.constant 0 : i32
      %25 = arith.addi %c0_i32_27, %24 : i32
      %c2_i32 = arith.constant 2 : i32
      %26 = arith.muli %c2_i32, %25 : i32
      %27 = arith.index_cast %26 : i32 to index
      %c0_28 = arith.constant 0 : index
      %c0_29 = arith.constant 0 : index
      %28 = vector.load %arg12[%27, %c0_28, %c0_29] : memref<8x8x128xf32, #tpu.memory_space<vmem>>, vector<1x8x128xf32>
      %29 = vector.shape_cast %28 : vector<1x8x128xf32> to vector<8x128xf32>
      %c0_30 = arith.constant 0 : index
      %c0_31 = arith.constant 0 : index
      %c0_32 = arith.constant 0 : index
      %30 = vector.load %arg11[%c0_30, %c0_31, %c0_32] : memref<2x8x128xf32, #tpu.memory_space<vmem>>, vector<1x8x128xf32>
      %31 = vector.shape_cast %30 : vector<1x8x128xf32> to vector<8x128xf32>
      %c0_33 = arith.constant 0 : index
      %c0_34 = arith.constant 0 : index
      %32 = vector.load %arg5[%c0_33, %c0_34] : memref<128x128xf32, #tpu.memory_space<vmem>>, vector<128x128xf32>
      %cst_35 = arith.constant dense<0.000000e+00> : vector<8x128xf32>
      %33 = tpu.matmul %31, %32, %cst_35 {dimension_numbers = #tpu.dot_dimension_numbers<[1], [0], [0], [1], [0, 0, 1, 1], [], []>} : vector<8x128xf32>, vector<128x128xf32>, vector<8x128xf32> -> vector<8x128xf32>
      %34 = arith.addf %29, %33 : vector<8x128xf32>
      %35 = math.tanh %34 : vector<8x128xf32>
      %c0_36 = arith.constant 0 : index
      %c0_37 = arith.constant 0 : index
      %c0_38 = arith.constant 0 : index
      %36 = vector.load %arg11[%c0_36, %c0_37, %c0_38] : memref<2x8x128xf32, #tpu.memory_space<vmem>>, vector<1x8x128xf32>
      %37 = vector.shape_cast %36 : vector<1x8x128xf32> to vector<8x128xf32>
      %38 = vector.shape_cast %35 : vector<8x128xf32> to vector<1x8x128xf32>
      tpu.vector_store %arg11[%c0_36, %c0_37, %c0_38], %38 {strides = array<i32>} : memref<2x8x128xf32, #tpu.memory_space<vmem>>, vector<1x8x128xf32>,
      %c1 = arith.constant 1 : index
      %c0_39 = arith.constant 0 : index
      %c0_40 = arith.constant 0 : index
      %39 = vector.load %arg11[%c1, %c0_39, %c0_40] : memref<2x8x128xf32, #tpu.memory_space<vmem>>, vector<1x8x128xf32>
      %40 = vector.shape_cast %39 : vector<1x8x128xf32> to vector<8x128xf32>
      %41 = tpu.concatenate %35, %40 in 1 : vector<8x128xf32>, vector<8x128xf32> -> vector<8x256xf32>
      %c0_41 = arith.constant 0 : index
      %c0_42 = arith.constant 0 : index
      %c0_43 = arith.constant 0 : index
      %42 = vector.load %arg6[%c0_41, %c0_42, %c0_43] : memref<1x256x128xf32, #tpu.memory_space<vmem>>, vector<1x256x128xf32>
      %43 = vector.shape_cast %42 : vector<1x256x128xf32> to vector<256x128xf32>
      %cst_44 = arith.constant dense<0.000000e+00> : vector<8x128xf32>
      %44 = tpu.matmul %41, %43, %cst_44 {dimension_numbers = #tpu.dot_dimension_numbers<[1], [0], [0], [1], [0, 0, 1, 1], [], []>} : vector<8x256xf32>, vector<256x128xf32>, vector<8x128xf32> -> vector<8x128xf32>
      %45 = vector.broadcast %13 : vector<1x128xf32> to vector<8x128xf32>
      %46 = arith.addf %44, %45 : vector<8x128xf32>
      %47 = math.tanh %46 : vector<8x128xf32>
      %c1_45 = arith.constant 1 : index
      %c0_46 = arith.constant 0 : index
      %c0_47 = arith.constant 0 : index
      %48 = vector.load %arg11[%c1_45, %c0_46, %c0_47] : memref<2x8x128xf32, #tpu.memory_space<vmem>>, vector<1x8x128xf32>
      %49 = vector.shape_cast %48 : vector<1x8x128xf32> to vector<8x128xf32>
      %50 = vector.shape_cast %47 : vector<8x128xf32> to vector<1x8x128xf32>
      tpu.vector_store %arg11[%c1_45, %c0_46, %c0_47], %50 {strides = array<i32>} : memref<2x8x128xf32, #tpu.memory_space<vmem>>, vector<1x8x128xf32>,
      %51 = arith.index_cast %26 : i32 to index
      %c0_48 = arith.constant 0 : index
      %c0_49 = arith.constant 0 : index
      %52 = vector.load %arg12[%51, %c0_48, %c0_49] : memref<8x8x128xf32, #tpu.memory_space<vmem>>, vector<1x8x128xf32>
      %53 = vector.shape_cast %52 : vector<1x8x128xf32> to vector<8x128xf32>
      %54 = vector.shape_cast %47 : vector<8x128xf32> to vector<1x8x128xf32>
      tpu.vector_store %arg12[%51, %c0_48, %c0_49], %54 {strides = array<i32>} : memref<8x8x128xf32, #tpu.memory_space<vmem>>, vector<1x8x128xf32>,
      %c1_i32_50 = arith.constant 1 : i32
      %55 = arith.addi %26, %c1_i32_50 : i32
      %56 = arith.index_cast %55 : i32 to index
      %c0_51 = arith.constant 0 : index
      %c0_52 = arith.constant 0 : index
      %57 = vector.load %arg12[%56, %c0_51, %c0_52] : memref<8x8x128xf32, #tpu.memory_space<vmem>>, vector<1x8x128xf32>
      %58 = vector.shape_cast %57 : vector<1x8x128xf32> to vector<8x128xf32>
      %c0_53 = arith.constant 0 : index
      %c0_54 = arith.constant 0 : index
      %c0_55 = arith.constant 0 : index
      %59 = vector.load %arg11[%c0_53, %c0_54, %c0_55] : memref<2x8x128xf32, #tpu.memory_space<vmem>>, vector<1x8x128xf32>
      %60 = vector.shape_cast %59 : vector<1x8x128xf32> to vector<8x128xf32>
      %c0_56 = arith.constant 0 : index
      %c0_57 = arith.constant 0 : index
      %61 = vector.load %arg5[%c0_56, %c0_57] : memref<128x128xf32, #tpu.memory_space<vmem>>, vector<128x128xf32>
      %cst_58 = arith.constant dense<0.000000e+00> : vector<8x128xf32>
      %62 = tpu.matmul %60, %61, %cst_58 {dimension_numbers = #tpu.dot_dimension_numbers<[1], [0], [0], [1], [0, 0, 1, 1], [], []>} : vector<8x128xf32>, vector<128x128xf32>, vector<8x128xf32> -> vector<8x128xf32>
      %63 = arith.addf %58, %62 : vector<8x128xf32>
      %64 = math.tanh %63 : vector<8x128xf32>
      %c0_59 = arith.constant 0 : index
      %c0_60 = arith.constant 0 : index
      %c0_61 = arith.constant 0 : index
      %65 = vector.load %arg11[%c0_59, %c0_60, %c0_61] : memref<2x8x128xf32, #tpu.memory_space<vmem>>, vector<1x8x128xf32>
      %66 = vector.shape_cast %65 : vector<1x8x128xf32> to vector<8x128xf32>
      %67 = vector.shape_cast %64 : vector<8x128xf32> to vector<1x8x128xf32>
      tpu.vector_store %arg11[%c0_59, %c0_60, %c0_61], %67 {strides = array<i32>} : memref<2x8x128xf32, #tpu.memory_space<vmem>>, vector<1x8x128xf32>,
      %c1_62 = arith.constant 1 : index
      %c0_63 = arith.constant 0 : index
      %c0_64 = arith.constant 0 : index
      %68 = vector.load %arg11[%c1_62, %c0_63, %c0_64] : memref<2x8x128xf32, #tpu.memory_space<vmem>>, vector<1x8x128xf32>
      %69 = vector.shape_cast %68 : vector<1x8x128xf32> to vector<8x128xf32>
      %70 = tpu.concatenate %64, %69 in 1 : vector<8x128xf32>, vector<8x128xf32> -> vector<8x256xf32>
      %c0_65 = arith.constant 0 : index
      %c0_66 = arith.constant 0 : index
      %c0_67 = arith.constant 0 : index
      %71 = vector.load %arg6[%c0_65, %c0_66, %c0_67] : memref<1x256x128xf32, #tpu.memory_space<vmem>>, vector<1x256x128xf32>
      %72 = vector.shape_cast %71 : vector<1x256x128xf32> to vector<256x128xf32>
      %cst_68 = arith.constant dense<0.000000e+00> : vector<8x128xf32>
      %73 = tpu.matmul %70, %72, %cst_68 {dimension_numbers = #tpu.dot_dimension_numbers<[1], [0], [0], [1], [0, 0, 1, 1], [], []>} : vector<8x256xf32>, vector<256x128xf32>, vector<8x128xf32> -> vector<8x128xf32>
      %74 = vector.broadcast %13 : vector<1x128xf32> to vector<8x128xf32>
      %75 = arith.addf %73, %74 : vector<8x128xf32>
      %76 = math.tanh %75 : vector<8x128xf32>
      %c1_69 = arith.constant 1 : index
      %c0_70 = arith.constant 0 : index
      %c0_71 = arith.constant 0 : index
      %77 = vector.load %arg11[%c1_69, %c0_70, %c0_71] : memref<2x8x128xf32, #tpu.memory_space<vmem>>, vector<1x8x128xf32>
      %78 = vector.shape_cast %77 : vector<1x8x128xf32> to vector<8x128xf32>
      %79 = vector.shape_cast %76 : vector<8x128xf32> to vector<1x8x128xf32>
      tpu.vector_store %arg11[%c1_69, %c0_70, %c0_71], %79 {strides = array<i32>} : memref<2x8x128xf32, #tpu.memory_space<vmem>>, vector<1x8x128xf32>,
      %80 = arith.index_cast %55 : i32 to index
      %c0_72 = arith.constant 0 : index
      %c0_73 = arith.constant 0 : index
      %81 = vector.load %arg12[%80, %c0_72, %c0_73] : memref<8x8x128xf32, #tpu.memory_space<vmem>>, vector<1x8x128xf32>
      %82 = vector.shape_cast %81 : vector<1x8x128xf32> to vector<8x128xf32>
      %83 = vector.shape_cast %76 : vector<8x128xf32> to vector<1x8x128xf32>
      tpu.vector_store %arg12[%80, %c0_72, %c0_73], %83 {strides = array<i32>} : memref<8x8x128xf32, #tpu.memory_space<vmem>>, vector<1x8x128xf32>,
    }
    %c4_i32_14 = arith.constant 4 : i32
    %c0_15 = arith.constant 0 : index
    %c0_16 = arith.constant 0 : index
    %c0_17 = arith.constant 0 : index
    %15 = vector.load %arg12[%c0_15, %c0_16, %c0_17] : memref<8x8x128xf32, #tpu.memory_space<vmem>>, vector<8x8x128xf32>
    %16 = vector.shape_cast %15 : vector<8x8x128xf32> to vector<64x128xf32>
    %c0_18 = arith.constant 0 : index
    %c0_19 = arith.constant 0 : index
    %17 = vector.load %arg8[%c0_18, %c0_19] : memref<128x16xf32, #tpu.memory_space<vmem>>, vector<128x16xf32>
    %cst_20 = arith.constant dense<0.000000e+00> : vector<64x16xf32>
    %18 = tpu.matmul %16, %17, %cst_20 {dimension_numbers = #tpu.dot_dimension_numbers<[1], [0], [0], [1], [0, 0, 1, 1], [], []>} : vector<64x128xf32>, vector<128x16xf32>, vector<64x16xf32> -> vector<64x16xf32>
    %c0_21 = arith.constant 0 : index
    %c0_22 = arith.constant 0 : index
    %19 = vector.load %arg9[%c0_21, %c0_22] : memref<1x16xf32, #tpu.memory_space<vmem>>, vector<1x16xf32>
    %20 = vector.broadcast %19 : vector<1x16xf32> to vector<64x16xf32>
    %21 = arith.addf %18, %20 : vector<64x16xf32>
    %22 = vector.shape_cast %21 : vector<64x16xf32> to vector<8x8x16xf32>
    %c0_23 = arith.constant 0 : index
    %c0_24 = arith.constant 0 : index
    %c0_25 = arith.constant 0 : index
    %23 = vector.load %arg10[%c0_23, %c0_24, %c0_25] : memref<8x8x16xf32, #tpu.memory_space<vmem>>, vector<8x8x16xf32>
    tpu.vector_store %arg10[%c0_23, %c0_24, %c0_25], %22 {strides = array<i32>} : memref<8x8x16xf32, #tpu.memory_space<vmem>>, vector<8x8x16xf32>,
    return
  }
  func.func @transform_0(%arg0: i32, %arg1: i32) -> (i32, i32, i32) {
    %c0_i32 = arith.constant 0 : i32
    %c0_i32_0 = arith.constant 0 : i32
    return %arg1, %arg0, %c0_i32 : i32, i32, i32
  }
  func.func @transform_1(%arg0: i32, %arg1: i32) -> (i32, i32) {
    %c0_i32 = arith.constant 0 : i32
    %c0_i32_0 = arith.constant 0 : i32
    %c0_i32_1 = arith.constant 0 : i32
    return %c0_i32, %c0_i32_0 : i32, i32
  }
  func.func @transform_2(%arg0: i32, %arg1: i32) -> (i32, i32) {
    %c0_i32 = arith.constant 0 : i32
    %c0_i32_0 = arith.constant 0 : i32
    %c0_i32_1 = arith.constant 0 : i32
    return %c0_i32, %c0_i32_0 : i32, i32
  }
  func.func @transform_3(%arg0: i32, %arg1: i32) -> (i32, i32) {
    %c0_i32 = arith.constant 0 : i32
    %c0_i32_0 = arith.constant 0 : i32
    %c0_i32_1 = arith.constant 0 : i32
    return %c0_i32, %c0_i32_0 : i32, i32
  }
  func.func @transform_4(%arg0: i32, %arg1: i32) -> (i32, i32, i32) {
    %c0_i32 = arith.constant 0 : i32
    %c0_i32_0 = arith.constant 0 : i32
    %c0_i32_1 = arith.constant 0 : i32
    %c0_i32_2 = arith.constant 0 : i32
    return %c0_i32, %c0_i32_0, %c0_i32_1 : i32, i32, i32
  }
  func.func @transform_5(%arg0: i32, %arg1: i32) -> (i32, i32, i32) {
    %c0_i32 = arith.constant 0 : i32
    %c0_i32_0 = arith.constant 0 : i32
    %c0_i32_1 = arith.constant 0 : i32
    %c0_i32_2 = arith.constant 0 : i32
    return %c0_i32, %c0_i32_0, %c0_i32_1 : i32, i32, i32
  }
  func.func @transform_6(%arg0: i32, %arg1: i32) -> (i32, i32) {
    %c0_i32 = arith.constant 0 : i32
    %c0_i32_0 = arith.constant 0 : i32
    %c0_i32_1 = arith.constant 0 : i32
    return %c0_i32, %c0_i32_0 : i32, i32
  }
  func.func @transform_7(%arg0: i32, %arg1: i32) -> (i32, i32) {
    %c0_i32 = arith.constant 0 : i32
    %c0_i32_0 = arith.constant 0 : i32
    %c0_i32_1 = arith.constant 0 : i32
    return %c0_i32, %c0_i32_0 : i32, i32
  }
  func.func @transform_8(%arg0: i32, %arg1: i32) -> (i32, i32, i32) {
    %c0_i32 = arith.constant 0 : i32
    %c0_i32_0 = arith.constant 0 : i32
    return %arg1, %arg0, %c0_i32 : i32, i32, i32
  }
}

</mosaic_0001>

<llo_original>
// kernel: tpu_custom_call.1
$region0: #{tpu_custom_call.1}
  #allocation0 [shape = 'u32[]', space=smem, size = 0x4, offset = 0x4, fixed_abs, tag = 'smem constant byte address 0x4 - core index']
  #allocation1 [shape = 'u32[144,128]{1,0:T(1,128)}', space=vmem, size = 0x12000, scoped, tag = 'internal scratch']
  #allocation2 [shape = 'f32[2,8,128]{2,1,0:T(8,128)}', space=vmem, size = 0x2000, scoped, tag = 'scratch operand']
  #allocation3 [shape = 'f32[8,8,128]{2,1,0:T(8,128)}', space=vmem, size = 0x8000, scoped, tag = 'scratch operand']
  %s0 = inlined_call_operand.hbm [shape: f32[8,8,32], index: 0, kind: input, shape index: {}]
  %s1 = inlined_call_operand.hbm [shape: f32[32,128], index: 1, kind: input, shape index: {}]
  %s2 = inlined_call_operand.vmem [shape: f32[1,128], index: 2, kind: input, shape index: {}]
  %s3 = inlined_call_operand.vmem [shape: f32[128,128], index: 3, kind: input, shape index: {}]
  %s4 = inlined_call_operand.hbm [shape: f32[1,256,128], index: 4, kind: input, shape index: {}]
  %s5 = inlined_call_operand.vmem [shape: f32[1,1,128], index: 5, kind: input, shape index: {}]
  %s6 = inlined_call_operand.vmem [shape: f32[128,16], index: 6, kind: input, shape index: {}]
  %s7 = inlined_call_operand.vmem [shape: f32[1,16], index: 7, kind: input, shape index: {}]
  %s8 = inlined_call_operand.hbm [shape: f32[8,8,16], index: 8, kind: output, shape index: {}]
  %s9 = sld [smem:[#allocation0]]
  $region65: #{tpu_custom_call.1} parent=0
    _
  %s11 = ssub.s32 1, %s9
  %s12 = scalar_select 0, %s11, %s9
  $region1: #{tpu_custom_call.1} parent=0
    #allocation4 [shape = 'u8[32768]{0}', space=vmem, size = 0x8000, scoped, tag = 'input window, operand 0, single buffered']
    #allocation5 [shape = 's32[1]{0}', space=sflag, size = 0x4, scoped, tag = 'scoped memory for tpu_custom_call.1']
    #allocation6 [shape = 's32[1]{0}', space=sflag, size = 0x4, scoped, tag = 'scoped memory for tpu_custom_call.1']
    #allocation7 [shape = 'u8[16384]{0}', space=vmem, size = 0x4000, scoped, tag = 'input window, operand 1, single buffered']
    #allocation8 [shape = 's32[1]{0}', space=sflag, size = 0x4, scoped, tag = 'scoped memory for tpu_custom_call.1']
    #allocation9 [shape = 'u8[131072]{0}', space=vmem, size = 0x20000, scoped, tag = 'input window, operand 4, single buffered']
    #allocation10 [shape = 'u8[32768]{0}', space=vmem, size = 0x8000, scoped, tag = 'output window, operand 0, single buffered']
    %13 = vsyncpa [#allocation5], 0
    %14 = vsyncpa [#allocation8], 0
    %15 = vsyncpa [#allocation6], 0
    // Predicated region
    $region2: #{tpu_custom_call.1} parent=1 // pred_check
      _
    $region3: #{tpu_custom_call.1} parent=1 // pred_check_branch
      %17 = sbr.rel (0) target = $region5
    $region4: #{tpu_custom_call.1} parent=1 // pred_region
      %s19 = ssub.s32 1024, 1024
      %20 = vsyncadd [#allocation5], %s19
      %s21 = sshll.u32 [#allocation4], 4
      %s22 = int_to_ptr.vmem [resolvable:$true] %s21
      %27 = dma.hbm_to_vmem [thread:$0]  %s0, 1024, %s22, [#allocation5], 128, 128, 8
    $region5: #{tpu_custom_call.1} parent=1 // pred_fallthru
      _
    // Predicated region
    $region6: #{tpu_custom_call.1} parent=1 // pred_check
      _
    $region7: #{tpu_custom_call.1} parent=1 // pred_check_branch
      %29 = sbr.rel (0) target = $region9
    $region8: #{tpu_custom_call.1} parent=1 // pred_region
      %s31 = ssub.s32 512, 512
      %32 = vsyncadd [#allocation8], %s31
      %s33 = sshll.u32 [#allocation7], 4
      %s34 = int_to_ptr.vmem [resolvable:$true] %s33
      %39 = dma.hbm_to_vmem [thread:$0]  %s1, 512, %s34, [#allocation8], 128, 128, 8
    $region9: #{tpu_custom_call.1} parent=1 // pred_fallthru
      _
    // Predicated region
    $region10: #{tpu_custom_call.1} parent=1 // pred_check
      _
    $region11: #{tpu_custom_call.1} parent=1 // pred_check_branch
      %41 = sbr.rel (0) target = $region13
    $region12: #{tpu_custom_call.1} parent=1 // pred_region
      _
    $region13: #{tpu_custom_call.1} parent=1 // pred_fallthru
      _
    // Predicated region
    $region14: #{tpu_custom_call.1} parent=1 // pred_check
      _
    $region15: #{tpu_custom_call.1} parent=1 // pred_check_branch
      %43 = sbr.rel (0) target = $region17
    $region16: #{tpu_custom_call.1} parent=1 // pred_region
      _
    $region17: #{tpu_custom_call.1} parent=1 // pred_fallthru
      _
    // Predicated region
    $region18: #{tpu_custom_call.1} parent=1 // pred_check
      _
    $region19: #{tpu_custom_call.1} parent=1 // pred_check_branch
      %45 = sbr.rel (0) target = $region21
    $region20: #{tpu_custom_call.1} parent=1 // pred_region
      %s47 = ssub.s32 4096, 4096
      %48 = vsyncadd [#allocation8], %s47
      %s49 = sshll.u32 [#allocation9], 4
      %s50 = int_to_ptr.vmem [resolvable:$true] %s49
      %55 = dma.hbm_to_vmem [thread:$0]  %s4, 4096, %s50, [#allocation8], 128, 128, 8
    $region21: #{tpu_custom_call.1} parent=1 // pred_fallthru
      _
    // Predicated region
    $region22: #{tpu_custom_call.1} parent=1 // pred_check
      _
    $region23: #{tpu_custom_call.1} parent=1 // pred_check_branch
      %57 = sbr.rel (0) target = $region25
    $region24: #{tpu_custom_call.1} parent=1 // pred_region
      _
    $region25: #{tpu_custom_call.1} parent=1 // pred_fallthru
      _
    // Predicated region
    $region26: #{tpu_custom_call.1} parent=1 // pred_check
      _
    $region27: #{tpu_custom_call.1} parent=1 // pred_check_branch
      %59 = sbr.rel (0) target = $region29
    $region28: #{tpu_custom_call.1} parent=1 // pred_region
      _
    $region29: #{tpu_custom_call.1} parent=1 // pred_fallthru
      _
    // Predicated region
    $region30: #{tpu_custom_call.1} parent=1 // pred_check
      _
    $region31: #{tpu_custom_call.1} parent=1 // pred_check_branch
      %61 = sbr.rel (0) target = $region33
    $region32: #{tpu_custom_call.1} parent=1 // pred_region
      _
    $region33: #{tpu_custom_call.1} parent=1 // pred_fallthru
      _
    // Predicated region
    $region34: #{tpu_custom_call.1} parent=1 // pred_check
      _
    $region35: #{tpu_custom_call.1} parent=1 // pred_check_branch
      %63 = sbr.rel (0) target = $region37
    $region36: #{tpu_custom_call.1} parent=1 // pred_region
      %64 = dma.done [#allocation5], 1024
    $region37: #{tpu_custom_call.1} parent=1 // pred_fallthru
      _
    // Predicated region
    $region38: #{tpu_custom_call.1} parent=1 // pred_check
      _
    $region39: #{tpu_custom_call.1} parent=1 // pred_check_branch
      %66 = sbr.rel (0) target = $region41
    $region40: #{tpu_custom_call.1} parent=1 // pred_region
      %67 = dma.done [#allocation8], 512
    $region41: #{tpu_custom_call.1} parent=1 // pred_fallthru
      _
    // Predicated region
    $region42: #{tpu_custom_call.1} parent=1 // pred_check
      _
    $region43: #{tpu_custom_call.1} parent=1 // pred_check_branch
      %69 = sbr.rel (0) target = $region45
    $region44: #{tpu_custom_call.1} parent=1 // pred_region
      %70 = dma.done [#allocation8], 4096
    $region45: #{tpu_custom_call.1} parent=1 // pred_fallthru
      _
    %p71 = scmp.eq.s32.totalorder 0, 0
    // Predicated region
    $region46: #{tpu_custom_call.1} parent=1 // pred_check
      %p72 = pneg %p71
    $region47: #{tpu_custom_call.1} parent=1 // pred_check_branch
      %74 = sbr.rel (%p72) target = $region49
    $region48: #{tpu_custom_call.1} parent=1 // pred_region
      %75 = vst [vmem:[#allocation2] sm:$0xff] 0.0
      %76 = vst [vmem:[#allocation2 + $0x8] sm:$0xff] 0.0
    $region49: #{tpu_custom_call.1} parent=1 // pred_fallthru
      _
    %v77 = vld [vmem:[#allocation4] sm:$0xff]
    %v78 = vld [vmem:[#allocation4 + $0x8] sm:$0xff]
    %v79 = vld [vmem:[#allocation4 + $0x10] sm:$0xff]
    %v80 = vld [vmem:[#allocation4 + $0x18] sm:$0xff]
    %v81 = vld [vmem:[#allocation4 + $0x20] sm:$0xff]
    %v82 = vld [vmem:[#allocation4 + $0x28] sm:$0xff]
    %v83 = vld [vmem:[#allocation4 + $0x30] sm:$0xff]
    %v84 = vld [vmem:[#allocation4 + $0x38] sm:$0xff]
    %v85 = vld [vmem:[#allocation7] sm:$0xff]
    %v86 = vld [vmem:[#allocation7 + $0x8] sm:$0xff]
    %v87 = vld [vmem:[#allocation7 + $0x10] sm:$0xff]
    %v88 = vld [vmem:[#allocation7 + $0x18] sm:$0xff]
    %v89 = vld [vmem:[%s2] sm:$0x1]
    %v91 = vlaneseq
    %v92 = vshrl.u32 %v91, 7
    %v93 = vsub.s32 0, %v92
    %v94 = vrot.slane %v89, %v93
    %vm96 = vcmask 261120
    %v98 = vsel %vm96, %v77, 0
    %v101 = vsel %vm96, %v78, 0
    %v104 = vsel %vm96, %v79, 0
    %v107 = vsel %vm96, %v80, 0
    %v110 = vsel %vm96, %v81, 0
    %v113 = vsel %vm96, %v82, 0
    %v116 = vsel %vm96, %v83, 0
    %v119 = vsel %vm96, %v84, 0
    %121 = vmatprep.subr.mxu0 0.0
    %122 = vmatpush1.msra.mxu0 0.0
    %123 = vmatprep.subr.mxu0 0.0
    %124 = vmatpush1.msra.mxu0 0.0
    %125 = vmatprep.subr.mxu0 0.0
    %126 = vmatpush1.msra.mxu0 0.0
    %127 = vmatprep.subr.mxu0 0.0
    %128 = vmatpush1.msra.mxu0 0.0
    %129 = vmatprep.subr.mxu0 0.0
    %130 = vmatpush1.msra.mxu0 0.0
    %131 = vmatprep.subr.mxu0 0.0
    %132 = vmatpush1.msra.mxu0 0.0
    %133 = vmatprep.subr.mxu0 0.0
    %134 = vmatpush1.msra.mxu0 0.0
    %135 = vmatprep.subr.mxu0 0.0
    %136 = vmatpush1.msra.mxu0 0.0
    %137 = vmatprep.subr.mxu0 0.0
    %138 = vmatpush1.msra.mxu0 0.0
    %139 = vmatprep.subr.mxu0 0.0
    %140 = vmatpush1.msra.mxu0 0.0
    %141 = vmatprep.subr.mxu0 0.0
    %142 = vmatpush1.msra.mxu0 0.0
    %143 = vmatprep.subr.mxu0 0.0
    %144 = vmatpush1.msra.mxu0 0.0
    %145 = vmatprep.subr.mxu0 0.0
    %146 = vmatpush1.msra.mxu0 %v88
    %147 = vmatprep.subr.mxu0 0.0
    %148 = vmatpush1.msra.mxu0 %v87
    %149 = vmatprep.subr.mxu0 0.0
    %150 = vmatpush1.msra.mxu0 %v86
    %151 = vmatprep.subr.mxu0 0.0
    %152 = vmatpush1.msra.mxu0 %v85
    %153 = vmatprep.subr.mxu0 0.0
    %154 = vmatpush2.msra.mxu0 0.0
    %155 = vmatprep.subr.mxu0 0.0
    %156 = vmatpush2.msra.mxu0 0.0
    %157 = vmatprep.subr.mxu0 0.0
    %158 = vmatpush2.msra.mxu0 0.0
    %159 = vmatprep.subr.mxu0 0.0
    %160 = vmatpush2.msra.mxu0 0.0
    %161 = vmatprep.subr.mxu0 0.0
    %162 = vmatpush2.msra.mxu0 0.0
    %163 = vmatprep.subr.mxu0 0.0
    %164 = vmatpush2.msra.mxu0 0.0
    %165 = vmatprep.subr.mxu0 0.0
    %166 = vmatpush2.msra.mxu0 0.0
    %167 = vmatprep.subr.mxu0 0.0
    %168 = vmatpush2.msra.mxu0 0.0
    %169 = vmatprep.subr.mxu0 0.0
    %170 = vmatpush2.msra.mxu0 0.0
    %171 = vmatprep.subr.mxu0 0.0
    %172 = vmatpush2.msra.mxu0 0.0
    %173 = vmatprep.subr.mxu0 0.0
    %174 = vmatpush2.msra.mxu0 0.0
    %175 = vmatprep.subr.mxu0 0.0
    %176 = vmatpush2.msra.mxu0 0.0
    %177 = vmatprep.subr.mxu0 0.0
    %178 = vmatpush2.msra.mxu0 0.0
    %179 = vmatprep.subr.mxu0 0.0
    %180 = vmatpush2.msra.mxu0 0.0
    %181 = vmatprep.subr.mxu0 0.0
    %182 = vmatpush2.msra.mxu0 0.0
    %183 = vmatprep.subr.mxu0 0.0
    %184 = vmatpush2.msra.mxu0 0.0
    %185 = vmatprep.mubr.f32.mxu0 0.0
    %186 = vmatmul.mubr.f32.gmra.mxu0 %v98
    %v187 = vpop.f32.mrf.mxu0
    %v188 = vadd.f32 %v94, %v187
    %v189 = vpop.f32.mrf.mxu0
    %190 = vmatprep.mubr.f32.mxu0 0.0
    %191 = vmatmul.mubr.f32.gmra.mxu0 %v101
    %v192 = vpop.f32.mrf.mxu0
    %v193 = vadd.f32 %v94, %v192
    %v194 = vpop.f32.mrf.mxu0
    %195 = vmatprep.mubr.f32.mxu0 0.0
    %196 = vmatmul.mubr.f32.gmra.mxu0 %v104
    %v197 = vpop.f32.mrf.mxu0
    %v198 = vadd.f32 %v94, %v197
    %v199 = vpop.f32.mrf.mxu0
    %200 = vmatprep.mubr.f32.mxu0 0.0
    %201 = vmatmul.mubr.f32.gmra.mxu0 %v107
    %v202 = vpop.f32.mrf.mxu0
    %v203 = vadd.f32 %v94, %v202
    %v204 = vpop.f32.mrf.mxu0
    %205 = vmatprep.mubr.f32.mxu0 0.0
    %206 = vmatmul.mubr.f32.gmra.mxu0 %v110
    %v207 = vpop.f32.mrf.mxu0
    %v208 = vadd.f32 %v94, %v207
    %v209 = vpop.f32.mrf.mxu0
    %210 = vmatprep.mubr.f32.mxu0 0.0
    %211 = vmatmul.mubr.f32.gmra.mxu0 %v113
    %v212 = vpop.f32.mrf.mxu0
    %v213 = vadd.f32 %v94, %v212
    %v214 = vpop.f32.mrf.mxu0
    %215 = vmatprep.mubr.f32.mxu0 0.0
    %216 = vmatmul.mubr.f32.gmra.mxu0 %v116
    %v217 = vpop.f32.mrf.mxu0
    %v218 = vadd.f32 %v94, %v217
    %v219 = vpop.f32.mrf.mxu0
    %220 = vmatprep.mubr.f32.mxu0 0.0
    %221 = vmatmul.mubr.f32.gmra.mxu0 %v119
    %v222 = vpop.f32.mrf.mxu0
    %v223 = vadd.f32 %v94, %v222
    %v224 = vpop.f32.mrf.mxu0
    %225 = vdwg.mxu0
    %226 = vst [vmem:[#allocation3] sm:$0xff] %v188
    %227 = vst [vmem:[#allocation3 + $0x8] sm:$0xff] %v193
    %228 = vst [vmem:[#allocation3 + $0x10] sm:$0xff] %v198
    %229 = vst [vmem:[#allocation3 + $0x18] sm:$0xff] %v203
    %230 = vst [vmem:[#allocation3 + $0x20] sm:$0xff] %v208
    %231 = vst [vmem:[#allocation3 + $0x28] sm:$0xff] %v213
    %232 = vst [vmem:[#allocation3 + $0x30] sm:$0xff] %v218
    %233 = vst [vmem:[#allocation3 + $0x38] sm:$0xff] %v223
    %v234 = vld [vmem:[%s5] sm:$0x1]
    loop: start=0, step=1, limit=4
    $region50: #{tpu_custom_call.1} parent=1 // loop_pre_header
      _
    $region51: #{tpu_custom_call.1} parent=1 // loop_header
      %s236 = sphi 0, %s240
      %p237 = scmp.ge.s32.totalorder %s236, 4
    $region52: #{tpu_custom_call.1} parent=1 // loop_header_branch
      %239 = sbr.rel (%p237) target = $region56
    $region53: #{tpu_custom_call.1} parent=1 // loop_body
      %s241 = smul.u32 %s236, 2
      %s242 = smul.u32 %s241, 8
      %s243 = scalar_lea.vmem [#allocation3], %s242
      %v244 = vld [vmem:[%s243] sm:$0xff]
      %v245 = vld [vmem:[#allocation2] sm:$0xff]
      %v246 = vld [vmem:[%s3] sm:$0xff]
      %v247 = vld [vmem:[%s3 + $0x8] sm:$0xff]
      %v248 = vld [vmem:[%s3 + $0x10] sm:$0xff]
      %v249 = vld [vmem:[%s3 + $0x18] sm:$0xff]
      %v250 = vld [vmem:[%s3 + $0x20] sm:$0xff]
      %v251 = vld [vmem:[%s3 + $0x28] sm:$0xff]
      %v252 = vld [vmem:[%s3 + $0x30] sm:$0xff]
      %v253 = vld [vmem:[%s3 + $0x38] sm:$0xff]
      %v254 = vld [vmem:[%s3 + $0x40] sm:$0xff]
      %v255 = vld [vmem:[%s3 + $0x48] sm:$0xff]
      %v256 = vld [vmem:[%s3 + $0x50] sm:$0xff]
      %v257 = vld [vmem:[%s3 + $0x58] sm:$0xff]
      %v258 = vld [vmem:[%s3 + $0x60] sm:$0xff]
      %v259 = vld [vmem:[%s3 + $0x68] sm:$0xff]
      %v260 = vld [vmem:[%s3 + $0x70] sm:$0xff]
      %v261 = vld [vmem:[%s3 + $0x78] sm:$0xff]
      %262 = vmatprep.subr.mxu0 0.0
      %263 = vmatpush1.msra.mxu0 %v261
      %264 = vmatprep.subr.mxu0 0.0
      %265 = vmatpush1.msra.mxu0 %v260
      %266 = vmatprep.subr.mxu0 0.0
      %267 = vmatpush1.msra.mxu0 %v259
      %268 = vmatprep.subr.mxu0 0.0
      %269 = vmatpush1.msra.mxu0 %v258
      %270 = vmatprep.subr.mxu0 0.0
      %271 = vmatpush1.msra.mxu0 %v257
      %272 = vmatprep.subr.mxu0 0.0
      %273 = vmatpush1.msra.mxu0 %v256
      %274 = vmatprep.subr.mxu0 0.0
      %275 = vmatpush1.msra.mxu0 %v255
      %276 = vmatprep.subr.mxu0 0.0
      %277 = vmatpush1.msra.mxu0 %v254
      %278 = vmatprep.subr.mxu0 0.0
      %279 = vmatpush1.msra.mxu0 %v253
      %280 = vmatprep.subr.mxu0 0.0
      %281 = vmatpush1.msra.mxu0 %v252
      %282 = vmatprep.subr.mxu0 0.0
      %283 = vmatpush1.msra.mxu0 %v251
      %284 = vmatprep.subr.mxu0 0.0
      %285 = vmatpush1.msra.mxu0 %v250
      %286 = vmatprep.subr.mxu0 0.0
      %287 = vmatpush1.msra.mxu0 %v249
      %288 = vmatprep.subr.mxu0 0.0
      %289 = vmatpush1.msra.mxu0 %v248
      %290 = vmatprep.subr.mxu0 0.0
      %291 = vmatpush1.msra.mxu0 %v247
      %292 = vmatprep.subr.mxu0 0.0
      %293 = vmatpush1.msra.mxu0 %v246
      %294 = vmatprep.subr.mxu0 0.0
      %295 = vmatpush2.msra.mxu0 0.0
      %296 = vmatprep.subr.mxu0 0.0
      %297 = vmatpush2.msra.mxu0 0.0
      %298 = vmatprep.subr.mxu0 0.0
      %299 = vmatpush2.msra.mxu0 0.0
      %300 = vmatprep.subr.mxu0 0.0
      %301 = vmatpush2.msra.mxu0 0.0
      %302 = vmatprep.subr.mxu0 0.0
      %303 = vmatpush2.msra.mxu0 0.0
      %304 = vmatprep.subr.mxu0 0.0
      %305 = vmatpush2.msra.mxu0 0.0
      %306 = vmatprep.subr.mxu0 0.0
      %307 = vmatpush2.msra.mxu0 0.0
      %308 = vmatprep.subr.mxu0 0.0
      %309 = vmatpush2.msra.mxu0 0.0
      %310 = vmatprep.subr.mxu0 0.0
      %311 = vmatpush2.msra.mxu0 0.0
      %312 = vmatprep.subr.mxu0 0.0
      %313 = vmatpush2.msra.mxu0 0.0
      %314 = vmatprep.subr.mxu0 0.0
      %315 = vmatpush2.msra.mxu0 0.0
      %316 = vmatprep.subr.mxu0 0.0
      %317 = vmatpush2.msra.mxu0 0.0
      %318 = vmatprep.subr.mxu0 0.0
      %319 = vmatpush2.msra.mxu0 0.0
      %320 = vmatprep.subr.mxu0 0.0
      %321 = vmatpush2.msra.mxu0 0.0
      %322 = vmatprep.subr.mxu0 0.0
      %323 = vmatpush2.msra.mxu0 0.0
      %324 = vmatprep.subr.mxu0 0.0
      %325 = vmatpush2.msra.mxu0 0.0
      %326 = vmatprep.mubr.f32.mxu0 0.0
      %327 = vmatmul.mubr.f32.gmra.mxu0 %v245
      %v328 = vpop.f32.mrf.mxu0
      %v329 = vadd.f32 0.0, %v328
      %v330 = vpop.f32.mrf.mxu0
      %331 = vdwg.mxu0
      %v332 = vadd.f32 %v244, %v329
      %v333 = vtanh.pop %v332
      %334 = vst [vmem:[#allocation2] sm:$0xff] %v333
      %s335 = scalar_lea.vmem [#allocation2], 8
      %v336 = vld [vmem:[%s335] sm:$0xff]
      %v337 = vld [vmem:[#allocation9] sm:$0xff]
      %v338 = vld [vmem:[#allocation9 + $0x8] sm:$0xff]
      %v339 = vld [vmem:[#allocation9 + $0x10] sm:$0xff]
      %v340 = vld [vmem:[#allocation9 + $0x18] sm:$0xff]
      %v341 = vld [vmem:[#allocation9 + $0x20] sm:$0xff]
      %v342 = vld [vmem:[#allocation9 + $0x28] sm:$0xff]
      %v343 = vld [vmem:[#allocation9 + $0x30] sm:$0xff]
      %v344 = vld [vmem:[#allocation9 + $0x38] sm:$0xff]
      %v345 = vld [vmem:[#allocation9 + $0x40] sm:$0xff]
      %v346 = vld [vmem:[#allocation9 + $0x48] sm:$0xff]
      %v347 = vld [vmem:[#allocation9 + $0x50] sm:$0xff]
      %v348 = vld [vmem:[#allocation9 + $0x58] sm:$0xff]
      %v349 = vld [vmem:[#allocation9 + $0x60] sm:$0xff]
      %v350 = vld [vmem:[#allocation9 + $0x68] sm:$0xff]
      %v351 = vld [vmem:[#allocation9 + $0x70] sm:$0xff]
      %v352 = vld [vmem:[#allocation9 + $0x78] sm:$0xff]
      %v353 = vld [vmem:[#allocation9 + $0x80] sm:$0xff]
      %v354 = vld [vmem:[#allocation9 + $0x88] sm:$0xff]
      %v355 = vld [vmem:[#allocation9 + $0x90] sm:$0xff]
      %v356 = vld [vmem:[#allocation9 + $0x98] sm:$0xff]
      %v357 = vld [vmem:[#allocation9 + $0xa0] sm:$0xff]
      %v358 = vld [vmem:[#allocation9 + $0xa8] sm:$0xff]
      %v359 = vld [vmem:[#allocation9 + $0xb0] sm:$0xff]
      %v360 = vld [vmem:[#allocation9 + $0xb8] sm:$0xff]
      %v361 = vld [vmem:[#allocation9 + $0xc0] sm:$0xff]
      %v362 = vld [vmem:[#allocation9 + $0xc8] sm:$0xff]
      %v363 = vld [vmem:[#allocation9 + $0xd0] sm:$0xff]
      %v364 = vld [vmem:[#allocation9 + $0xd8] sm:$0xff]
      %v365 = vld [vmem:[#allocation9 + $0xe0] sm:$0xff]
      %v366 = vld [vmem:[#allocation9 + $0xe8] sm:$0xff]
      %v367 = vld [vmem:[#allocation9 + $0xf0] sm:$0xff]
      %v368 = vld [vmem:[#allocation9 + $0xf8] sm:$0xff]
      %v370 = vlaneseq
      %v371 = vshrl.u32 %v370, 7
      %v372 = vsub.s32 0, %v371
      %v373 = vrot.slane %v234, %v372
      %375 = vmatprep.subr.mxu0 0.0
      %376 = vmatpush1.msra.mxu0 %v352
      %377 = vmatprep.subr.mxu0 0.0
      %378 = vmatpush1.msra.mxu0 %v351
      %379 = vmatprep.subr.mxu0 0.0
      %380 = vmatpush1.msra.mxu0 %v350
      %381 = vmatprep.subr.mxu0 0.0
      %382 = vmatpush1.msra.mxu0 %v349
      %383 = vmatprep.subr.mxu0 0.0
      %384 = vmatpush1.msra.mxu0 %v348
      %385 = vmatprep.subr.mxu0 0.0
      %386 = vmatpush1.msra.mxu0 %v347
      %387 = vmatprep.subr.mxu0 0.0
      %388 = vmatpush1.msra.mxu0 %v346
      %389 = vmatprep.subr.mxu0 0.0
      %390 = vmatpush1.msra.mxu0 %v345
      %391 = vmatprep.subr.mxu0 0.0
      %392 = vmatpush1.msra.mxu0 %v344
      %393 = vmatprep.subr.mxu0 0.0
      %394 = vmatpush1.msra.mxu0 %v343
      %395 = vmatprep.subr.mxu0 0.0
      %396 = vmatpush1.msra.mxu0 %v342
      %397 = vmatprep.subr.mxu0 0.0
      %398 = vmatpush1.msra.mxu0 %v341
      %399 = vmatprep.subr.mxu0 0.0
      %400 = vmatpush1.msra.mxu0 %v340
      %401 = vmatprep.subr.mxu0 0.0
      %402 = vmatpush1.msra.mxu0 %v339
      %403 = vmatprep.subr.mxu0 0.0
      %404 = vmatpush1.msra.mxu0 %v338
      %405 = vmatprep.subr.mxu0 0.0
      %406 = vmatpush1.msra.mxu0 %v337
      %407 = vmatprep.subr.mxu0 0.0
      %408 = vmatpush2.msra.mxu0 %v368
      %409 = vmatprep.subr.mxu0 0.0
      %410 = vmatpush2.msra.mxu0 %v367
      %411 = vmatprep.subr.mxu0 0.0
      %412 = vmatpush2.msra.mxu0 %v366
      %413 = vmatprep.subr.mxu0 0.0
      %414 = vmatpush2.msra.mxu0 %v365
      %415 = vmatprep.subr.mxu0 0.0
      %416 = vmatpush2.msra.mxu0 %v364
      %417 = vmatprep.subr.mxu0 0.0
      %418 = vmatpush2.msra.mxu0 %v363
      %419 = vmatprep.subr.mxu0 0.0
      %420 = vmatpush2.msra.mxu0 %v362
      %421 = vmatprep.subr.mxu0 0.0
      %422 = vmatpush2.msra.mxu0 %v361
      %423 = vmatprep.subr.mxu0 0.0
      %424 = vmatpush2.msra.mxu0 %v360
      %425 = vmatprep.subr.mxu0 0.0
      %426 = vmatpush2.msra.mxu0 %v359
      %427 = vmatprep.subr.mxu0 0.0
      %428 = vmatpush2.msra.mxu0 %v358
      %429 = vmatprep.subr.mxu0 0.0
      %430 = vmatpush2.msra.mxu0 %v357
      %431 = vmatprep.subr.mxu0 0.0
      %432 = vmatpush2.msra.mxu0 %v356
      %433 = vmatprep.subr.mxu0 0.0
      %434 = vmatpush2.msra.mxu0 %v355
      %435 = vmatprep.subr.mxu0 0.0
      %436 = vmatpush2.msra.mxu0 %v354
      %437 = vmatprep.subr.mxu0 0.0
      %438 = vmatpush2.msra.mxu0 %v353
      %439 = vmatprep.mubr.f32.mxu0 %v336
      %440 = vmatmul.mubr.f32.gmra.mxu0 %v333
      %v441 = vpop.f32.mrf.mxu0
      %v442 = vadd.f32 %v373, %v441
      %v443 = vpop.f32.mrf.mxu0
      %444 = vdwg.mxu0
      %v445 = vtanh.pop %v442
      %446 = vst [vmem:[%s335] sm:$0xff] %v445
      %447 = vst [vmem:[%s243] sm:$0xff] %v445
      %s448 = sadd.s32 %s241, 1
      %s449 = smul.u32 %s448, 8
      %s450 = scalar_lea.vmem [#allocation3], %s449
      %v451 = vld [vmem:[%s450] sm:$0xff]
      %v452 = vld [vmem:[#allocation2] sm:$0xff]
      %v453 = vld [vmem:[%s3] sm:$0xff]
      %v454 = vld [vmem:[%s3 + $0x8] sm:$0xff]
      %v455 = vld [vmem:[%s3 + $0x10] sm:$0xff]
      %v456 = vld [vmem:[%s3 + $0x18] sm:$0xff]
      %v457 = vld [vmem:[%s3 + $0x20] sm:$0xff]
      %v458 = vld [vmem:[%s3 + $0x28] sm:$0xff]
      %v459 = vld [vmem:[%s3 + $0x30] sm:$0xff]
      %v460 = vld [vmem:[%s3 + $0x38] sm:$0xff]
      %v461 = vld [vmem:[%s3 + $0x40] sm:$0xff]
      %v462 = vld [vmem:[%s3 + $0x48] sm:$0xff]
      %v463 = vld [vmem:[%s3 + $0x50] sm:$0xff]
      %v464 = vld [vmem:[%s3 + $0x58] sm:$0xff]
      %v465 = vld [vmem:[%s3 + $0x60] sm:$0xff]
      %v466 = vld [vmem:[%s3 + $0x68] sm:$0xff]
      %v467 = vld [vmem:[%s3 + $0x70] sm:$0xff]
      %v468 = vld [vmem:[%s3 + $0x78] sm:$0xff]
      %469 = vmatprep.subr.mxu0 0.0
      %470 = vmatpush1.msra.mxu0 %v468
      %471 = vmatprep.subr.mxu0 0.0
      %472 = vmatpush1.msra.mxu0 %v467
      %473 = vmatprep.subr.mxu0 0.0
      %474 = vmatpush1.msra.mxu0 %v466
      %475 = vmatprep.subr.mxu0 0.0
      %476 = vmatpush1.msra.mxu0 %v465
      %477 = vmatprep.subr.mxu0 0.0
      %478 = vmatpush1.msra.mxu0 %v464
      %479 = vmatprep.subr.mxu0 0.0
      %480 = vmatpush1.msra.mxu0 %v463
      %481 = vmatprep.subr.mxu0 0.0
      %482 = vmatpush1.msra.mxu0 %v462
      %483 = vmatprep.subr.mxu0 0.0
      %484 = vmatpush1.msra.mxu0 %v461
      %485 = vmatprep.subr.mxu0 0.0
      %486 = vmatpush1.msra.mxu0 %v460
      %487 = vmatprep.subr.mxu0 0.0
      %488 = vmatpush1.msra.mxu0 %v459
      %489 = vmatprep.subr.mxu0 0.0
      %490 = vmatpush1.msra.mxu0 %v458
      %491 = vmatprep.subr.mxu0 0.0
      %492 = vmatpush1.msra.mxu0 %v457
      %493 = vmatprep.subr.mxu0 0.0
      %494 = vmatpush1.msra.mxu0 %v456
      %495 = vmatprep.subr.mxu0 0.0
      %496 = vmatpush1.msra.mxu0 %v455
      %497 = vmatprep.subr.mxu0 0.0
      %498 = vmatpush1.msra.mxu0 %v454
      %499 = vmatprep.subr.mxu0 0.0
      %500 = vmatpush1.msra.mxu0 %v453
      %501 = vmatprep.subr.mxu0 0.0
      %502 = vmatpush2.msra.mxu0 0.0
      %503 = vmatprep.subr.mxu0 0.0
      %504 = vmatpush2.msra.mxu0 0.0
      %505 = vmatprep.subr.mxu0 0.0
      %506 = vmatpush2.msra.mxu0 0.0
      %507 = vmatprep.subr.mxu0 0.0
      %508 = vmatpush2.msra.mxu0 0.0
      %509 = vmatprep.subr.mxu0 0.0
      %510 = vmatpush2.msra.mxu0 0.0
      %511 = vmatprep.subr.mxu0 0.0
      %512 = vmatpush2.msra.mxu0 0.0
      %513 = vmatprep.subr.mxu0 0.0
      %514 = vmatpush2.msra.mxu0 0.0
      %515 = vmatprep.subr.mxu0 0.0
      %516 = vmatpush2.msra.mxu0 0.0
      %517 = vmatprep.subr.mxu0 0.0
      %518 = vmatpush2.msra.mxu0 0.0
      %519 = vmatprep.subr.mxu0 0.0
      %520 = vmatpush2.msra.mxu0 0.0
      %521 = vmatprep.subr.mxu0 0.0
      %522 = vmatpush2.msra.mxu0 0.0
      %523 = vmatprep.subr.mxu0 0.0
      %524 = vmatpush2.msra.mxu0 0.0
      %525 = vmatprep.subr.mxu0 0.0
      %526 = vmatpush2.msra.mxu0 0.0
      %527 = vmatprep.subr.mxu0 0.0
      %528 = vmatpush2.msra.mxu0 0.0
      %529 = vmatprep.subr.mxu0 0.0
      %530 = vmatpush2.msra.mxu0 0.0
      %531 = vmatprep.subr.mxu0 0.0
      %532 = vmatpush2.msra.mxu0 0.0
      %533 = vmatprep.mubr.f32.mxu0 0.0
      %534 = vmatmul.mubr.f32.gmra.mxu0 %v452
      %v535 = vpop.f32.mrf.mxu0
      %v536 = vadd.f32 0.0, %v535
      %v537 = vpop.f32.mrf.mxu0
      %538 = vdwg.mxu0
      %v539 = vadd.f32 %v451, %v536
      %v540 = vtanh.pop %v539
      %541 = vst [vmem:[#allocation2] sm:$0xff] %v540
      %v542 = vld [vmem:[%s335] sm:$0xff]
      %v543 = vld [vmem:[#allocation9] sm:$0xff]
      %v544 = vld [vmem:[#allocation9 + $0x8] sm:$0xff]
      %v545 = vld [vmem:[#allocation9 + $0x10] sm:$0xff]
      %v546 = vld [vmem:[#allocation9 + $0x18] sm:$0xff]
      %v547 = vld [vmem:[#allocation9 + $0x20] sm:$0xff]
      %v548 = vld [vmem:[#allocation9 + $0x28] sm:$0xff]
      %v549 = vld [vmem:[#allocation9 + $0x30] sm:$0xff]
      %v550 = vld [vmem:[#allocation9 + $0x38] sm:$0xff]
      %v551 = vld [vmem:[#allocation9 + $0x40] sm:$0xff]
      %v552 = vld [vmem:[#allocation9 + $0x48] sm:$0xff]
      %v553 = vld [vmem:[#allocation9 + $0x50] sm:$0xff]
      %v554 = vld [vmem:[#allocation9 + $0x58] sm:$0xff]
      %v555 = vld [vmem:[#allocation9 + $0x60] sm:$0xff]
      %v556 = vld [vmem:[#allocation9 + $0x68] sm:$0xff]
      %v557 = vld [vmem:[#allocation9 + $0x70] sm:$0xff]
      %v558 = vld [vmem:[#allocation9 + $0x78] sm:$0xff]
      %v559 = vld [vmem:[#allocation9 + $0x80] sm:$0xff]
      %v560 = vld [vmem:[#allocation9 + $0x88] sm:$0xff]
      %v561 = vld [vmem:[#allocation9 + $0x90] sm:$0xff]
      %v562 = vld [vmem:[#allocation9 + $0x98] sm:$0xff]
      %v563 = vld [vmem:[#allocation9 + $0xa0] sm:$0xff]
      %v564 = vld [vmem:[#allocation9 + $0xa8] sm:$0xff]
      %v565 = vld [vmem:[#allocation9 + $0xb0] sm:$0xff]
      %v566 = vld [vmem:[#allocation9 + $0xb8] sm:$0xff]
      %v567 = vld [vmem:[#allocation9 + $0xc0] sm:$0xff]
      %v568 = vld [vmem:[#allocation9 + $0xc8] sm:$0xff]
      %v569 = vld [vmem:[#allocation9 + $0xd0] sm:$0xff]
      %v570 = vld [vmem:[#allocation9 + $0xd8] sm:$0xff]
      %v571 = vld [vmem:[#allocation9 + $0xe0] sm:$0xff]
      %v572 = vld [vmem:[#allocation9 + $0xe8] sm:$0xff]
      %v573 = vld [vmem:[#allocation9 + $0xf0] sm:$0xff]
      %v574 = vld [vmem:[#allocation9 + $0xf8] sm:$0xff]
      %575 = vmatprep.subr.mxu0 0.0
      %576 = vmatpush1.msra.mxu0 %v558
      %577 = vmatprep.subr.mxu0 0.0
      %578 = vmatpush1.msra.mxu0 %v557
      %579 = vmatprep.subr.mxu0 0.0
      %580 = vmatpush1.msra.mxu0 %v556
      %581 = vmatprep.subr.mxu0 0.0
      %582 = vmatpush1.msra.mxu0 %v555
      %583 = vmatprep.subr.mxu0 0.0
      %584 = vmatpush1.msra.mxu0 %v554
      %585 = vmatprep.subr.mxu0 0.0
      %586 = vmatpush1.msra.mxu0 %v553
      %587 = vmatprep.subr.mxu0 0.0
      %588 = vmatpush1.msra.mxu0 %v552
      %589 = vmatprep.subr.mxu0 0.0
      %590 = vmatpush1.msra.mxu0 %v551
      %591 = vmatprep.subr.mxu0 0.0
      %592 = vmatpush1.msra.mxu0 %v550
      %593 = vmatprep.subr.mxu0 0.0
      %594 = vmatpush1.msra.mxu0 %v549
      %595 = vmatprep.subr.mxu0 0.0
      %596 = vmatpush1.msra.mxu0 %v548
      %597 = vmatprep.subr.mxu0 0.0
      %598 = vmatpush1.msra.mxu0 %v547
      %599 = vmatprep.subr.mxu0 0.0
      %600 = vmatpush1.msra.mxu0 %v546
      %601 = vmatprep.subr.mxu0 0.0
      %602 = vmatpush1.msra.mxu0 %v545
      %603 = vmatprep.subr.mxu0 0.0
      %604 = vmatpush1.msra.mxu0 %v544
      %605 = vmatprep.subr.mxu0 0.0
      %606 = vmatpush1.msra.mxu0 %v543
      %607 = vmatprep.subr.mxu0 0.0
      %608 = vmatpush2.msra.mxu0 %v574
      %609 = vmatprep.subr.mxu0 0.0
      %610 = vmatpush2.msra.mxu0 %v573
      %611 = vmatprep.subr.mxu0 0.0
      %612 = vmatpush2.msra.mxu0 %v572
      %613 = vmatprep.subr.mxu0 0.0
      %614 = vmatpush2.msra.mxu0 %v571
      %615 = vmatprep.subr.mxu0 0.0
      %616 = vmatpush2.msra.mxu0 %v570
      %617 = vmatprep.subr.mxu0 0.0
      %618 = vmatpush2.msra.mxu0 %v569
      %619 = vmatprep.subr.mxu0 0.0
      %620 = vmatpush2.msra.mxu0 %v568
      %621 = vmatprep.subr.mxu0 0.0
      %622 = vmatpush2.msra.mxu0 %v567
      %623 = vmatprep.subr.mxu0 0.0
      %624 = vmatpush2.msra.mxu0 %v566
      %625 = vmatprep.subr.mxu0 0.0
      %626 = vmatpush2.msra.mxu0 %v565
      %627 = vmatprep.subr.mxu0 0.0
      %628 = vmatpush2.msra.mxu0 %v564
      %629 = vmatprep.subr.mxu0 0.0
      %630 = vmatpush2.msra.mxu0 %v563
      %631 = vmatprep.subr.mxu0 0.0
      %632 = vmatpush2.msra.mxu0 %v562
      %633 = vmatprep.subr.mxu0 0.0
      %634 = vmatpush2.msra.mxu0 %v561
      %635 = vmatprep.subr.mxu0 0.0
      %636 = vmatpush2.msra.mxu0 %v560
      %637 = vmatprep.subr.mxu0 0.0
      %638 = vmatpush2.msra.mxu0 %v559
      %639 = vmatprep.mubr.f32.mxu0 %v542
      %640 = vmatmul.mubr.f32.gmra.mxu0 %v540
      %v641 = vpop.f32.mrf.mxu0
      %v642 = vadd.f32 %v373, %v641
      %v643 = vpop.f32.mrf.mxu0
      %644 = vdwg.mxu0
      %v645 = vtanh.pop %v642
      %646 = vst [vmem:[%s335] sm:$0xff] %v645
      %647 = vst [vmem:[%s450] sm:$0xff] %v645
    $region54: #{tpu_custom_call.1} parent=1 // loop_footer
      %s240 = sadd.s32 1, %s236
    $region55: #{tpu_custom_call.1} parent=1 // loop_footer_branch
      %235 = sbr.rel target = $region51
    $region56: #{tpu_custom_call.1} parent=1 // loop_exit
      _
    %v648 = vld [vmem:[#allocation3] sm:$0xff]
    %v649 = vld [vmem:[#allocation3 + $0x8] sm:$0xff]
    %v650 = vld [vmem:[#allocation3 + $0x10] sm:$0xff]
    %v651 = vld [vmem:[#allocation3 + $0x18] sm:$0xff]
    %v652 = vld [vmem:[#allocation3 + $0x20] sm:$0xff]
    %v653 = vld [vmem:[#allocation3 + $0x28] sm:$0xff]
    %v654 = vld [vmem:[#allocation3 + $0x30] sm:$0xff]
    %v655 = vld [vmem:[#allocation3 + $0x38] sm:$0xff]
    %v656 = vld [vmem:[%s6] sm:$0xff]
    %v657 = vld [vmem:[%s6 + $0x8] sm:$0xff]
    %v658 = vld [vmem:[%s6 + $0x10] sm:$0xff]
    %v659 = vld [vmem:[%s6 + $0x18] sm:$0xff]
    %v660 = vld [vmem:[%s6 + $0x20] sm:$0xff]
    %v661 = vld [vmem:[%s6 + $0x28] sm:$0xff]
    %v662 = vld [vmem:[%s6 + $0x30] sm:$0xff]
    %v663 = vld [vmem:[%s6 + $0x38] sm:$0xff]
    %v664 = vld [vmem:[%s6 + $0x40] sm:$0xff]
    %v665 = vld [vmem:[%s6 + $0x48] sm:$0xff]
    %v666 = vld [vmem:[%s6 + $0x50] sm:$0xff]
    %v667 = vld [vmem:[%s6 + $0x58] sm:$0xff]
    %v668 = vld [vmem:[%s6 + $0x60] sm:$0xff]
    %v669 = vld [vmem:[%s6 + $0x68] sm:$0xff]
    %v670 = vld [vmem:[%s6 + $0x70] sm:$0xff]
    %v671 = vld [vmem:[%s6 + $0x78] sm:$0xff]
    %v672 = vld [vmem:[%s7] sm:$0x1]
    %v674 = vlaneseq
    %v675 = vshrl.u32 %v674, 7
    %v676 = vsub.s32 0, %v675
    %v677 = vrot.slane %v672, %v676
    %679 = vmatprep.subr.mxu0 0.0
    %680 = vmatpush1.msra.mxu0 %v671
    %681 = vmatprep.subr.mxu0 0.0
    %682 = vmatpush1.msra.mxu0 %v670
    %683 = vmatprep.subr.mxu0 0.0
    %684 = vmatpush1.msra.mxu0 %v669
    %685 = vmatprep.subr.mxu0 0.0
    %686 = vmatpush1.msra.mxu0 %v668
    %687 = vmatprep.subr.mxu0 0.0
    %688 = vmatpush1.msra.mxu0 %v667
    %689 = vmatprep.subr.mxu0 0.0
    %690 = vmatpush1.msra.mxu0 %v666
    %691 = vmatprep.subr.mxu0 0.0
    %692 = vmatpush1.msra.mxu0 %v665
    %693 = vmatprep.subr.mxu0 0.0
    %694 = vmatpush1.msra.mxu0 %v664
    %695 = vmatprep.subr.mxu0 0.0
    %696 = vmatpush1.msra.mxu0 %v663
    %697 = vmatprep.subr.mxu0 0.0
    %698 = vmatpush1.msra.mxu0 %v662
    %699 = vmatprep.subr.mxu0 0.0
    %700 = vmatpush1.msra.mxu0 %v661
    %701 = vmatprep.subr.mxu0 0.0
    %702 = vmatpush1.msra.mxu0 %v660
    %703 = vmatprep.subr.mxu0 0.0
    %704 = vmatpush1.msra.mxu0 %v659
    %705 = vmatprep.subr.mxu0 0.0
    %706 = vmatpush1.msra.mxu0 %v658
    %707 = vmatprep.subr.mxu0 0.0
    %708 = vmatpush1.msra.mxu0 %v657
    %709 = vmatprep.subr.mxu0 0.0
    %710 = vmatpush1.msra.mxu0 %v656
    %711 = vmatprep.subr.mxu0 0.0
    %712 = vmatpush2.msra.mxu0 0.0
    %713 = vmatprep.subr.mxu0 0.0
    %714 = vmatpush2.msra.mxu0 0.0
    %715 = vmatprep.subr.mxu0 0.0
    %716 = vmatpush2.msra.mxu0 0.0
    %717 = vmatprep.subr.mxu0 0.0
    %718 = vmatpush2.msra.mxu0 0.0
    %719 = vmatprep.subr.mxu0 0.0
    %720 = vmatpush2.msra.mxu0 0.0
    %721 = vmatprep.subr.mxu0 0.0
    %722 = vmatpush2.msra.mxu0 0.0
    %723 = vmatprep.subr.mxu0 0.0
    %724 = vmatpush2.msra.mxu0 0.0
    %725 = vmatprep.subr.mxu0 0.0
    %726 = vmatpush2.msra.mxu0 0.0
    %727 = vmatprep.subr.mxu0 0.0
    %728 = vmatpush2.msra.mxu0 0.0
    %729 = vmatprep.subr.mxu0 0.0
    %730 = vmatpush2.msra.mxu0 0.0
    %731 = vmatprep.subr.mxu0 0.0
    %732 = vmatpush2.msra.mxu0 0.0
    %733 = vmatprep.subr.mxu0 0.0
    %734 = vmatpush2.msra.mxu0 0.0
    %735 = vmatprep.subr.mxu0 0.0
    %736 = vmatpush2.msra.mxu0 0.0
    %737 = vmatprep.subr.mxu0 0.0
    %738 = vmatpush2.msra.mxu0 0.0
    %739 = vmatprep.subr.mxu0 0.0
    %740 = vmatpush2.msra.mxu0 0.0
    %741 = vmatprep.subr.mxu0 0.0
    %742 = vmatpush2.msra.mxu0 0.0
    %743 = vmatprep.mubr.f32.mxu0 0.0
    %744 = vmatmul.mubr.f32.gmra.mxu0 %v648
    %v745 = vpop.f32.mrf.mxu0
    %v746 = vadd.f32 %v677, %v745
    %v747 = vpop.f32.mrf.mxu0
    %748 = vmatprep.mubr.f32.mxu0 0.0
    %749 = vmatmul.mubr.f32.gmra.mxu0 %v649
    %v750 = vpop.f32.mrf.mxu0
    %v751 = vadd.f32 %v677, %v750
    %v752 = vpop.f32.mrf.mxu0
    %753 = vmatprep.mubr.f32.mxu0 0.0
    %754 = vmatmul.mubr.f32.gmra.mxu0 %v650
    %v755 = vpop.f32.mrf.mxu0
    %v756 = vadd.f32 %v677, %v755
    %v757 = vpop.f32.mrf.mxu0
    %758 = vmatprep.mubr.f32.mxu0 0.0
    %759 = vmatmul.mubr.f32.gmra.mxu0 %v651
    %v760 = vpop.f32.mrf.mxu0
    %v761 = vadd.f32 %v677, %v760
    %v762 = vpop.f32.mrf.mxu0
    %763 = vmatprep.mubr.f32.mxu0 0.0
    %764 = vmatmul.mubr.f32.gmra.mxu0 %v652
    %v765 = vpop.f32.mrf.mxu0
    %v766 = vadd.f32 %v677, %v765
    %v767 = vpop.f32.mrf.mxu0
    %768 = vmatprep.mubr.f32.mxu0 0.0
    %769 = vmatmul.mubr.f32.gmra.mxu0 %v653
    %v770 = vpop.f32.mrf.mxu0
    %v771 = vadd.f32 %v677, %v770
    %v772 = vpop.f32.mrf.mxu0
    %773 = vmatprep.mubr.f32.mxu0 0.0
    %774 = vmatmul.mubr.f32.gmra.mxu0 %v654
    %v775 = vpop.f32.mrf.mxu0
    %v776 = vadd.f32 %v677, %v775
    %v777 = vpop.f32.mrf.mxu0
    %778 = vmatprep.mubr.f32.mxu0 0.0
    %779 = vmatmul.mubr.f32.gmra.mxu0 %v655
    %v780 = vpop.f32.mrf.mxu0
    %v781 = vadd.f32 %v677, %v780
    %v782 = vpop.f32.mrf.mxu0
    %783 = vdwg.mxu0
    %vm784 = vcmask 130048
    %785 = vst.msk [vmem:[#allocation10] sm:$0xff] %vm784, %v746
    %786 = vst.msk [vmem:[#allocation10 + $0x8] sm:$0xff] %vm784, %v751
    %787 = vst.msk [vmem:[#allocation10 + $0x10] sm:$0xff] %vm784, %v756
    %788 = vst.msk [vmem:[#allocation10 + $0x18] sm:$0xff] %vm784, %v761
    %789 = vst.msk [vmem:[#allocation10 + $0x20] sm:$0xff] %vm784, %v766
    %790 = vst.msk [vmem:[#allocation10 + $0x28] sm:$0xff] %vm784, %v771
    %791 = vst.msk [vmem:[#allocation10 + $0x30] sm:$0xff] %vm784, %v776
    %792 = vst.msk [vmem:[#allocation10 + $0x38] sm:$0xff] %vm784, %v781
    // Predicated region
    $region57: #{tpu_custom_call.1} parent=1 // pred_check
      _
    $region58: #{tpu_custom_call.1} parent=1 // pred_check_branch
      %794 = sbr.rel (0) target = $region60
    $region59: #{tpu_custom_call.1} parent=1 // pred_region
      %s796 = ssub.s32 1024, 1024
      %797 = vsyncadd [#allocation6], %s796
      %s798 = sshll.u32 [#allocation10], 4
      %s799 = int_to_ptr.vmem [resolvable:$true] %s798
      %804 = dma.vmem_to_hbm [thread:$0]  %s799, 1024, %s8, [#allocation6], 128, 128, 8
    $region60: #{tpu_custom_call.1} parent=1 // pred_fallthru
      _
    // Predicated region
    $region61: #{tpu_custom_call.1} parent=1 // pred_check
      _
    $region62: #{tpu_custom_call.1} parent=1 // pred_check_branch
      %806 = sbr.rel (0) target = $region64
    $region63: #{tpu_custom_call.1} parent=1 // pred_region
      %807 = dma.done [#allocation6], 1024
    $region64: #{tpu_custom_call.1} parent=1 // pred_fallthru
      _
    %808 = vsyncpa [#allocation5], 1
    %809 = vsyncpa [#allocation8], 1
    %810 = vsyncpa [#allocation6], 1

</llo_original>
